<compile_context>
chip_gen: v5e
topology: v5e:2x2
jax: 0.10.0
libtpu: 0.0.40
codegen_flags: <defaults>
</compile_context>

<pallas_src>
import functools

import jax
import jax.numpy as jnp
from jax import lax
from jax.experimental import pallas as pl
from jax.experimental.pallas import tpu as pltpu


def _nproto_cf_kernel(noise_ref, proto_ref, p2_ref, onehot_ref, out_ref,
                      *, rt, batch, r_total, precision):
    """One grid step: CE over up to `rt` random-times, fused into one matmul.

    noise_ref : (rt, batch, D)    queries, native dtype
    proto_ref : (W, D)            prototypes, same dtype as queries, resident
    p2_ref    : (W, 1)            ||proto_c||^2, f32, resident
    onehot_ref: (W, rt*batch)     one-hot(labels) tiled over rt, f32, resident
    out_ref   : (8, 128)          raw CE sum (scalar broadcast), f32, resident
    """
    blk = pl.program_id(0)

    @pl.when(blk == 0)
    def _init():
        out_ref[...] = jnp.zeros_like(out_ref)

    rt_b, b_b, d_b = noise_ref.shape
    m_cols = rt_b * b_b

    # (rt, batch, D) -> (rt*batch, D): batch is a multiple of the sublane tile
    # in the test config, so this merge is layout-free.
    q = noise_ref[...].reshape(m_cols, d_b)          # native dtype
    proto = proto_ref[...]                           # (W, D), same dtype as q

    # g[c, m] = proto_c . q_m  — a single MXU matmul with f32 accumulation.
    g = lax.dot_general(proto, q, (((1,), (1,)), ((), ())),
                        preferred_element_type=jnp.float32,
                        precision=precision)         # (W, M)

    # logits = -(||q||^2 + ||p||^2 - 2 g); ||q||^2 is constant per column and
    # cancels inside the cross-entropy, so work with s = 2 g - ||p||^2 only.
    s = 2.0 * g - p2_ref[...]                        # (W, M), lane-dense

    m = jnp.max(s, axis=0, keepdims=True)                          # (1, M)
    lse = m + jnp.log(jnp.sum(jnp.exp(s - m), axis=0, keepdims=True))
    s_y = jnp.sum(s * onehot_ref[...], axis=0, keepdims=True)      # label logit
    ce = lse - s_y                                                  # (1, M)

    # Mask columns that belong to padded tail rows (r >= r_total).
    n_valid = jnp.minimum(r_total - blk * rt, rt) * batch
    col = lax.broadcasted_iota(jnp.int32, ce.shape, 1)
    out_ref[...] += jnp.sum(jnp.where(col < n_valid, ce, 0.0))


def _vmem_capacity_bytes():
    try:
        info = pltpu.get_tpu_info()
        return int(getattr(info, "vmem_capacity_bytes", 64 << 20))
    except Exception:
        return 64 << 20            # conservative: v7x physical per-TC VMEM


def noise_proto_cf_loss(original_output, noise_output, num_instances=8, w=1.0,
                        random_times=None, rt=None, vmem_budget_bytes=None):
    """Pallas implementation of NoiseProtoCFLoss.forward.

    original_output: (batch, D) with batch = n_ways * num_instances
    noise_output   : (R, batch, D) noisy query embeddings (f32 or bf16)
    """
    R, batch, D = noise_output.shape
    assert original_output.shape == (batch, D)
    assert batch % num_instances == 0
    n_ways = batch // num_instances
    if random_times is None:
        random_times = R

    dtype = noise_output.dtype
    itemsize = dtype.itemsize

    # ---- tiny, once-per-call constants (computed in XLA, DMA'd once) -------
    proto_f32 = (original_output.astype(jnp.float32)
                 .reshape(n_ways, num_instances, D).mean(axis=1))     # (W, D)
    proto_c = proto_f32.astype(dtype)                # matmul operand, query dtype
    p2 = jnp.sum(proto_c.astype(jnp.float32) ** 2, axis=-1,
                 keepdims=True)                                        # (W, 1) f32
    labels = jnp.repeat(jnp.arange(n_ways, dtype=jnp.int32), num_instances)
    onehot_wb = jax.nn.one_hot(labels, n_ways, dtype=jnp.float32).T    # (W, batch)

    # ---- tile-size selection (generation-aware) -----------------------------
    cap = _vmem_capacity_bytes()
    if vmem_budget_bytes is None:
        # budget for the double-buffered noise stream; scales with the chip's
        # physical VMEM (64 MiB on v7x, 128 MiB on v5e/v6e).
        vmem_budget_bytes = min(cap // 3, 40 << 20)
    per_r = batch * D * itemsize
    if rt is None:
        rt = max(1, int(vmem_budget_bytes // (2 * per_r)))
    rt = int(max(1, min(rt, R)))
    nbk = -(-R // rt)                                 # number of R-blocks

    onehot_wm = jnp.tile(onehot_wb, (1, rt))                           # (W, rt*batch)

    # vmem limit: double-buffered noise + (double-buffered) constants + output
    # + generous epilogue headroom; stays well under physical VMEM.
    needed = 2 * rt * per_r
    needed += 2 * (proto_c.size * proto_c.dtype.itemsize
                   + p2.size * 4 + onehot_wm.size * 4)
    needed += 2 * 8 * 128 * 4
    needed += 6 * (n_ways + 2) * rt * batch * 4
    vmem_limit = int(min(max(needed + (2 << 20), 16 << 20), int(cap * 0.75)))

    # f32 inputs keep f32-grade logits (multi-pass cost is negligible for this
    # HBM-bound kernel); bf16 inputs use the single-pass MXU default.
    precision = lax.Precision.HIGHEST if dtype == jnp.float32 else None

    kernel = functools.partial(_nproto_cf_kernel, rt=rt, batch=batch,
                               r_total=R, precision=precision)

    flops = 2 * R * batch * D * n_ways + 10 * R * batch * n_ways
    transcendentals = R * batch * (n_ways + 1)
    bytes_accessed = (noise_output.size * itemsize
                      + proto_c.size * proto_c.dtype.itemsize
                      + p2.size * 4 + onehot_wm.size * 4 + 8 * 128 * 4)

    out = pl.pallas_call(
        kernel,
        out_shape=jax.ShapeDtypeStruct((8, 128), jnp.float32),
        grid_spec=pltpu.PrefetchScalarGridSpec(
            num_scalar_prefetch=0,
            grid=(nbk,),
            in_specs=[
                pl.BlockSpec((rt, batch, D), lambda i: (i, 0, 0)),
                pl.BlockSpec((n_ways, D), lambda i: (0, 0)),
                pl.BlockSpec((n_ways, 1), lambda i: (0, 0)),
                pl.BlockSpec((n_ways, rt * batch), lambda i: (0, 0)),
            ],
            out_specs=pl.BlockSpec((8, 128), lambda i: (0, 0)),
        ),
        compiler_params=pltpu.CompilerParams(
            dimension_semantics=("arbitrary",),
            vmem_limit_bytes=vmem_limit),
        cost_estimate=pl.CostEstimate(flops=int(flops),
                                      transcendentals=int(transcendentals),
                                      bytes_accessed=int(bytes_accessed)),
    )(noise_output, proto_c, p2, onehot_wm)

    total = out[0, 0]
    loss = total / (batch * random_times) * w
    log = {"NProtoCFLoss": loss}
    return loss, log


def _reference(original_output, noise_output, num_instances, w):
    """Pure-JAX mirror of the PyTorch forward (explicit pairwise distances)."""
    R, batch, D = noise_output.shape
    n_ways = batch // num_instances
    x = original_output.astype(jnp.float32)
    proto = x.reshape(n_ways, num_instances, D).mean(axis=1)
    labels = jnp.repeat(jnp.arange(n_ways), num_instances)
    total = jnp.float32(0.0)
    for r in range(R):
        q = noise_output[r].astype(jnp.float32)
        d2 = jnp.sum((q[:, None, :] - proto[None, :, :]) ** 2, axis=-1)
        logits = -d2
        lse = jax.nn.logsumexp(logits, axis=-1)
        ce = jnp.mean(lse - logits[jnp.arange(batch), labels])
        total = total + ce
    loss = total / R * w
    return loss, {"NProtoCFLoss": loss}


def _reference_fused(original_output, noise_output, num_instances, w):
    """Reference that mirrors the kernel's (dtype-consistent) cancellation form."""
    R, batch, D = noise_output.shape
    n_ways = batch // num_instances
    proto = (original_output.astype(jnp.float32)
             .reshape(n_ways, num_instances, D).mean(axis=1))
    proto_c = proto.astype(noise_output.dtype)
    p2 = jnp.sum(proto_c.astype(jnp.float32) ** 2, axis=-1)
    labels = jnp.repeat(jnp.arange(n_ways), num_instances)
    total = jnp.float32(0.0)
    for r in range(R):
        q = noise_output[r]
        g = jnp.dot(q, proto_c.T, preferred_element_type=jnp.float32)
        s = 2.0 * g - p2[None, :]
        lse = jax.nn.logsumexp(s, axis=-1)
        total = total + jnp.mean(lse - s[jnp.arange(batch), labels])
    return total / R * w


if __name__ == "__main__":
    key = jax.random.PRNGKey(0)
    n_ways, n_shots, D, R = 4, 8, 128, 6     # batch = 32, random_times = 6
    batch = n_ways * n_shots
    w = 0.5

    k1, k2 = jax.random.split(key)
    original_output = jax.random.normal(k1, (batch, D), dtype=jnp.float32)
    noise_output = jax.random.normal(k2, (R, batch, D), dtype=jnp.float32)

    # f32 path: rt=4 deliberately exercises multi-block accumulation into the
    # resident output plus the masked padded-tail boundary block (R=6).
    loss, log = noise_proto_cf_loss(original_output, noise_output,
                                    num_instances=n_shots, w=w, rt=4)
    loss = jax.block_until_ready(loss)
    ref_loss, ref_log = _reference(original_output, noise_output, n_shots, w)
    assert jnp.allclose(loss, ref_loss, rtol=1e-4, atol=1e-4), (loss, ref_loss)
    assert jnp.allclose(log["NProtoCFLoss"], ref_log["NProtoCFLoss"],
                        rtol=1e-4, atol=1e-4)

    # bf16 path: native-dtype streaming (no in-kernel upcast, single-pass MXU).
    noise_bf16 = noise_output.astype(jnp.bfloat16)
    loss_bf16, _ = noise_proto_cf_loss(original_output, noise_bf16,
                                       num_instances=n_shots, w=w, rt=4)
    loss_bf16 = jax.block_until_ready(loss_bf16)
    ref_bf16 = _reference_fused(original_output, noise_bf16, n_shots, w)
    assert jnp.allclose(loss_bf16, ref_bf16, rtol=5e-3, atol=5e-3), (loss_bf16,
                                                                     ref_bf16)

    print("KERNEL_OK")
</pallas_src>

<mosaic_0001>
module attributes {stable_mosaic.version = 11 : i64} {
  func.func @_nproto_cf_kernel(%arg0: i32, %arg1: memref<4x32x128xf32, #tpu.memory_space<vmem>>, %arg2: memref<4x128xf32, #tpu.memory_space<vmem>>, %arg3: memref<4x1xf32, #tpu.memory_space<vmem>>, %arg4: memref<4x128xf32, #tpu.memory_space<vmem>>, %arg5: memref<8x128xf32, #tpu.memory_space<vmem>>) attributes {dimension_semantics = [#tpu.dimension_semantics<arbitrary>], iteration_bounds = array<i64: 2>, scalar_prefetch = 0 : i64, scratch_operands = 0 : i64, tpu.core_type = #tpu.core_type<tc>, window_params = [{transform_indices = @transform_0, window_bounds = array<i64: 4, 32, 128>}, {pipeline_mode = #tpu.pipeline_mode<synchronous>, transform_indices = @transform_1, window_bounds = array<i64: 4, 128>}, {pipeline_mode = #tpu.pipeline_mode<synchronous>, transform_indices = @transform_2, window_bounds = array<i64: 4, 1>}, {pipeline_mode = #tpu.pipeline_mode<synchronous>, transform_indices = @transform_3, window_bounds = array<i64: 4, 128>}, {pipeline_mode = #tpu.pipeline_mode<synchronous>, transform_indices = @transform_4, window_bounds = array<i64: 8, 128>}]} {
    %c0_i32 = arith.constant 0 : i32
    %0 = arith.cmpi eq, %arg0, %c0_i32 : i32
    %1 = arith.extui %0 : i1 to i32
    %c0_i32_0 = arith.constant 0 : i32
    %2 = arith.cmpi ne, %1, %c0_i32_0 : i32
    scf.if %2 {
      %cst_20 = arith.constant 0.000000e+00 : f32
      %43 = vector.broadcast %cst_20 : f32 to vector<8x128xf32>
      %c0_21 = arith.constant 0 : index
      %c0_22 = arith.constant 0 : index
      %44 = vector.load %arg5[%c0_21, %c0_22] : memref<8x128xf32, #tpu.memory_space<vmem>>, vector<8x128xf32>
      tpu.vector_store %arg5[%c0_21, %c0_22], %43 {strides = array<i32>} : memref<8x128xf32, #tpu.memory_space<vmem>>, vector<8x128xf32>,
    } else {
    }
    %c0 = arith.constant 0 : index
    %c0_1 = arith.constant 0 : index
    %c0_2 = arith.constant 0 : index
    %3 = vector.load %arg1[%c0, %c0_1, %c0_2] : memref<4x32x128xf32, #tpu.memory_space<vmem>>, vector<4x32x128xf32>
    %4 = vector.shape_cast %3 : vector<4x32x128xf32> to vector<128x128xf32>
    %c0_3 = arith.constant 0 : index
    %c0_4 = arith.constant 0 : index
    %5 = vector.load %arg2[%c0_3, %c0_4] : memref<4x128xf32, #tpu.memory_space<vmem>>, vector<4x128xf32>
    %cst = arith.constant dense<0.000000e+00> : vector<4x128xf32>
    %6 = tpu.matmul %5, %4, %cst {dimension_numbers = #tpu.dot_dimension_numbers<[1], [1], [0], [0], [0, 0, 1, 0], [], []>, precision = #tpu.contract_precision<fp32>} : vector<4x128xf32>, vector<128x128xf32>, vector<4x128xf32> -> vector<4x128xf32>
    %cst_5 = arith.constant 2.000000e+00 : f32
    %7 = vector.broadcast %cst_5 : f32 to vector<4x128xf32>
    %8 = arith.mulf %7, %6 : vector<4x128xf32>
    %c0_6 = arith.constant 0 : index
    %c0_7 = arith.constant 0 : index
    %9 = vector.load %arg3[%c0_6, %c0_7] : memref<4x1xf32, #tpu.memory_space<vmem>>, vector<4x1xf32>
    %10 = vector.broadcast %9 : vector<4x1xf32> to vector<4x128xf32>
    %11 = arith.subf %8, %10 : vector<4x128xf32>
    %cst_8 = arith.constant dense<0xFF800000> : vector<128xf32>
    %12 = vector.multi_reduction <maximumf>, %11, %cst_8 [0] : vector<4x128xf32> to vector<128xf32>
    %13 = vector.shape_cast %12 : vector<128xf32> to vector<1x128xf32>
    %14 = vector.broadcast %13 : vector<1x128xf32> to vector<4x128xf32>
    %15 = arith.subf %11, %14 : vector<4x128xf32>
    %16 = math.exp %15 : vector<4x128xf32>
    %cst_9 = arith.constant dense<0.000000e+00> : vector<128xf32>
    %17 = vector.multi_reduction <add>, %16, %cst_9 [0] : vector<4x128xf32> to vector<128xf32>
    %18 = vector.shape_cast %17 : vector<128xf32> to vector<1x128xf32>
    %19 = math.log %18 : vector<1x128xf32>
    %20 = arith.addf %13, %19 : vector<1x128xf32>
    %c0_10 = arith.constant 0 : index
    %c0_11 = arith.constant 0 : index
    %21 = vector.load %arg4[%c0_10, %c0_11] : memref<4x128xf32, #tpu.memory_space<vmem>>, vector<4x128xf32>
    %22 = arith.mulf %11, %21 : vector<4x128xf32>
    %cst_12 = arith.constant dense<0.000000e+00> : vector<128xf32>
    %23 = vector.multi_reduction <add>, %22, %cst_12 [0] : vector<4x128xf32> to vector<128xf32>
    %24 = vector.shape_cast %23 : vector<128xf32> to vector<1x128xf32>
    %25 = arith.subf %20, %24 : vector<1x128xf32>
    %c4_i32 = arith.constant 4 : i32
    %26 = arith.muli %arg0, %c4_i32 : i32
    %c6_i32 = arith.constant 6 : i32
    %27 = arith.subi %c6_i32, %26 : i32
    %c4_i32_13 = arith.constant 4 : i32
    %28 = arith.minsi %27, %c4_i32_13 : i32
    %c32_i32 = arith.constant 32 : i32
    %29 = arith.muli %28, %c32_i32 : i32
    %30 = tpu.iota {dimensions = array<i32: 1>} : vector<1x128xi32>
    %c0_14 = arith.constant 0 : index
    %c0_15 = arith.constant 0 : index
    %31 = vector.load %arg5[%c0_14, %c0_15] : memref<8x128xf32, #tpu.memory_space<vmem>>, vector<8x128xf32>
    %32 = vector.broadcast %29 : i32 to vector<1x128xi32>
    %33 = arith.cmpi slt, %30, %32 : vector<1x128xi32>
    %cst_16 = arith.constant 0.000000e+00 : f32
    %34 = vector.broadcast %cst_16 : f32 to vector<1x128xf32>
    %35 = arith.select %33, %25, %34 : vector<1x128xi1>, vector<1x128xf32>
    %36 = vector.shape_cast %35 : vector<1x128xf32> to vector<1x1x128xf32>
    %cst_17 = arith.constant dense<0.000000e+00> : vector<1xf32>
    %37 = vector.multi_reduction <add>, %36, %cst_17 [1, 2] : vector<1x1x128xf32> to vector<1xf32>
    %38 = vector.shape_cast %37 : vector<1xf32> to vector<1x1x1xf32>
    %39 = vector.extract %38[0, 0, 0] : f32 from vector<1x1x1xf32>
    %40 = vector.broadcast %39 : f32 to vector<8x128xf32>
    %41 = arith.addf %31, %40 : vector<8x128xf32>
    %c0_18 = arith.constant 0 : index
    %c0_19 = arith.constant 0 : index
    %42 = vector.load %arg5[%c0_18, %c0_19] : memref<8x128xf32, #tpu.memory_space<vmem>>, vector<8x128xf32>
    tpu.vector_store %arg5[%c0_18, %c0_19], %41 {strides = array<i32>} : memref<8x128xf32, #tpu.memory_space<vmem>>, vector<8x128xf32>,
    return
  }
  func.func @transform_0(%arg0: i32) -> (i32, i32, i32) {
    %c0_i32 = arith.constant 0 : i32
    %c0_i32_0 = arith.constant 0 : i32
    %c0_i32_1 = arith.constant 0 : i32
    return %arg0, %c0_i32, %c0_i32_0 : i32, i32, i32
  }
  func.func @transform_1(%arg0: i32) -> (i32, i32) {
    %c0_i32 = arith.constant 0 : i32
    %c0_i32_0 = arith.constant 0 : i32
    %c0_i32_1 = arith.constant 0 : i32
    return %c0_i32, %c0_i32_0 : i32, i32
  }
  func.func @transform_2(%arg0: i32) -> (i32, i32) {
    %c0_i32 = arith.constant 0 : i32
    %c0_i32_0 = arith.constant 0 : i32
    %c0_i32_1 = arith.constant 0 : i32
    return %c0_i32, %c0_i32_0 : i32, i32
  }
  func.func @transform_3(%arg0: i32) -> (i32, i32) {
    %c0_i32 = arith.constant 0 : i32
    %c0_i32_0 = arith.constant 0 : i32
    %c0_i32_1 = arith.constant 0 : i32
    return %c0_i32, %c0_i32_0 : i32, i32
  }
  func.func @transform_4(%arg0: i32) -> (i32, i32) {
    %c0_i32 = arith.constant 0 : i32
    %c0_i32_0 = arith.constant 0 : i32
    %c0_i32_1 = arith.constant 0 : i32
    return %c0_i32, %c0_i32_0 : i32, i32
  }
}

</mosaic_0001>

<llo_original>
// kernel: tpu_custom_call.1
$region0: #{tpu_custom_call.1}
  #allocation0 [shape = 'u32[]', space=smem, size = 0x4, offset = 0x4, fixed_abs, tag = 'smem constant byte address 0x4 - core index']
  #allocation1 [shape = 'u32[72,128]{1,0:T(1,128)}', space=vmem, size = 0x9000, scoped, tag = 'internal scratch']
  %s0 = inlined_call_operand.hbm [shape: f32[6,32,128], index: 0, kind: input, shape index: {}]
  %s1 = inlined_call_operand.vmem [shape: f32[4,128], index: 1, kind: input, shape index: {}]
  %s2 = inlined_call_operand.vmem [shape: f32[4,1], index: 2, kind: input, shape index: {}]
  %s3 = inlined_call_operand.hbm [shape: f32[4,128], index: 3, kind: input, shape index: {}]
  %s4 = inlined_call_operand.hbm [shape: f32[8,128], index: 4, kind: output, shape index: {}]
  %s5 = sld [smem:[#allocation0]]
  $region61: #{tpu_custom_call.1} parent=0
    _
  %s7 = ssub.s32 1, %s5
  %s8 = scalar_select 0, %s7, %s5
  $region1: #{tpu_custom_call.1} parent=0
    #allocation2 [shape = 'u8[131072]{0}', space=vmem, size = 0x20000, scoped, tag = 'input window, operand 0']
    #allocation3 [shape = 's32[2]{0}', space=sflag, size = 0x8, scoped, tag = 'scoped memory for tpu_custom_call.1']
    #allocation4 [shape = 's32[2]{0}', space=sflag, size = 0x8, scoped, tag = 'scoped memory for tpu_custom_call.1']
    #allocation5 [shape = 'u8[2048]{0}', space=vmem, size = 0x800, scoped, tag = 'input window, operand 3, single buffered']
    #allocation6 [shape = 's32[1]{0}', space=sflag, size = 0x4, scoped, tag = 'scoped memory for tpu_custom_call.1']
    #allocation7 [shape = 'u8[4096]{0}', space=vmem, size = 0x1000, scoped, tag = 'output window, operand 0, single buffered']
    %9 = vsyncpa [#allocation3], 0
    %s10 = scalar_lea.sflag [#allocation3], 1
    %11 = vsyncpa %s10, 0
    %12 = vsyncpa [#allocation6], 0
    %13 = vsyncpa [#allocation4], 0
    loop: start=0, step=1, limit=4
    $region2: #{tpu_custom_call.1} parent=1 // loop_pre_header
      _
    $region3: #{tpu_custom_call.1} parent=1 // loop_header
      %s15 = sphi 0, %s19
      %p16 = scmp.ge.s32.totalorder %s15, 4
      %s25 = sphi 0, %s27
      %s28 = sphi 0, %s25
      %s29 = sphi 0, %s28
      %s45 = sphi 0, %s29
      %s49 = sphi 0, %s49
      %s51 = sphi 0, %s49
      %s52 = sphi 0, %s51
      %s66 = sphi 0, %s52
      %s70 = sphi 0, %s70
      %s72 = sphi 0, %s70
      %s73 = sphi 0, %s72
      %s87 = sphi 0, %s73
      %s91 = sphi 0, %s91
      %s93 = sphi 0, %s91
      %s94 = sphi 0, %s93
      %s108 = sphi 0, %s94
      %s112 = sphi 0, %s112
      %s114 = sphi 0, %s112
      %s115 = sphi 0, %s114
      %s129 = sphi 0, %s115
    $region4: #{tpu_custom_call.1} parent=1 // loop_header_branch
      %18 = sbr.rel (%p16) target = $region8
    $region5: #{tpu_custom_call.1} parent=1 // loop_body
      %s20 = ssub.s32 %s15, 1
      %s21 = ssub.s32 %s15, 2
      %s22 = sadd.s32 %s15, 1
      %s23 = ssub.s32 %s15, %s22
      %p24 = scmp.eq.s32.totalorder %s23, 0
      %s26 = sadd.s32 %s25, 1
      %s27 = scalar_select %p24, %s25, %s26
      %p30 = pneg %p24
      %p31 = scmp.eq.s32.totalorder %s15, 1
      %p32 = por %p30, %p31
      %p33 = scmp.ne.s32.totalorder %s25, %s28
      %p34 = scmp.eq.s32.totalorder %s15, 0
      %p35 = por %p33, %p34
      %p36 = scmp.ne.s32.totalorder %s25, %s28
      %p37 = scmp.eq.s32.totalorder %s20, 1
      %p38 = por %p36, %p37
      %p39 = scmp.ne.s32.totalorder %s28, %s29
      %p40 = scmp.eq.s32.totalorder %s20, 0
      %p41 = por %p39, %p40
      %p42 = scmp.ne.s32.totalorder %s28, %s29
      %p43 = scmp.eq.s32.totalorder %s21, 1
      %p44 = por %p42, %p43
      %p46 = scmp.ne.s32.totalorder %s29, %s45
      %p47 = scmp.eq.s32.totalorder %s21, 0
      %p48 = por %p46, %p47
      %s50 = sadd.s32 %s49, 1
      %p53 = scmp.eq.s32.totalorder %s15, 1
      %p54 = scmp.ne.s32.totalorder %s49, %s51
      %p55 = scmp.eq.s32.totalorder %s15, 0
      %p56 = por %p54, %p55
      %p57 = scmp.ne.s32.totalorder %s49, %s51
      %p58 = scmp.eq.s32.totalorder %s20, 1
      %p59 = por %p57, %p58
      %p60 = scmp.ne.s32.totalorder %s51, %s52
      %p61 = scmp.eq.s32.totalorder %s20, 0
      %p62 = por %p60, %p61
      %p63 = scmp.ne.s32.totalorder %s51, %s52
      %p64 = scmp.eq.s32.totalorder %s21, 1
      %p65 = por %p63, %p64
      %p67 = scmp.ne.s32.totalorder %s52, %s66
      %p68 = scmp.eq.s32.totalorder %s21, 0
      %p69 = por %p67, %p68
      %s71 = sadd.s32 %s70, 1
      %p74 = scmp.eq.s32.totalorder %s15, 1
      %p75 = scmp.ne.s32.totalorder %s70, %s72
      %p76 = scmp.eq.s32.totalorder %s15, 0
      %p77 = por %p75, %p76
      %p78 = scmp.ne.s32.totalorder %s70, %s72
      %p79 = scmp.eq.s32.totalorder %s20, 1
      %p80 = por %p78, %p79
      %p81 = scmp.ne.s32.totalorder %s72, %s73
      %p82 = scmp.eq.s32.totalorder %s20, 0
      %p83 = por %p81, %p82
      %p84 = scmp.ne.s32.totalorder %s72, %s73
      %p85 = scmp.eq.s32.totalorder %s21, 1
      %p86 = por %p84, %p85
      %p88 = scmp.ne.s32.totalorder %s73, %s87
      %p89 = scmp.eq.s32.totalorder %s21, 0
      %p90 = por %p88, %p89
      %s92 = sadd.s32 %s91, 1
      %p95 = scmp.eq.s32.totalorder %s15, 1
      %p96 = scmp.ne.s32.totalorder %s91, %s93
      %p97 = scmp.eq.s32.totalorder %s15, 0
      %p98 = por %p96, %p97
      %p99 = scmp.ne.s32.totalorder %s91, %s93
      %p100 = scmp.eq.s32.totalorder %s20, 1
      %p101 = por %p99, %p100
      %p102 = scmp.ne.s32.totalorder %s93, %s94
      %p103 = scmp.eq.s32.totalorder %s20, 0
      %p104 = por %p102, %p103
      %p105 = scmp.ne.s32.totalorder %s93, %s94
      %p106 = scmp.eq.s32.totalorder %s21, 1
      %p107 = por %p105, %p106
      %p109 = scmp.ne.s32.totalorder %s94, %s108
      %p110 = scmp.eq.s32.totalorder %s21, 0
      %p111 = por %p109, %p110
      %s113 = sadd.s32 %s112, 1
      %p116 = scmp.eq.s32.totalorder %s15, 1
      %p117 = scmp.ne.s32.totalorder %s112, %s114
      %p118 = scmp.eq.s32.totalorder %s15, 0
      %p119 = por %p117, %p118
      %p120 = scmp.ne.s32.totalorder %s112, %s114
      %p121 = scmp.eq.s32.totalorder %s20, 1
      %p122 = por %p120, %p121
      %p123 = scmp.ne.s32.totalorder %s114, %s115
      %p124 = scmp.eq.s32.totalorder %s20, 0
      %p125 = por %p123, %p124
      %p126 = scmp.ne.s32.totalorder %s114, %s115
      %p127 = scmp.eq.s32.totalorder %s21, 1
      %p128 = por %p126, %p127
      %p130 = scmp.ne.s32.totalorder %s115, %s129
      %p131 = scmp.eq.s32.totalorder %s21, 0
      %p132 = por %p130, %p131
      %p133 = scmp.le.s32.totalorder 1, %s15
      %p134 = scmp.lt.s32.totalorder %s15, 3
      %p135 = pnand %p133, %p134
      %p136 = pneg %p135
      // Predicated region
      $region9: #{tpu_custom_call.1} parent=5 // pred_check
        _
      $region10: #{tpu_custom_call.1} parent=5 // pred_check_branch
        %138 = sbr.rel (%p135) target = $region12
      $region11: #{tpu_custom_call.1} parent=5 // pred_region
        %s139 = ssub.s32 %s15, 1
        // Predicated region
        $region13: #{tpu_custom_call.1} parent=11 // pred_check
          %p140 = pneg %p62
        $region14: #{tpu_custom_call.1} parent=11 // pred_check_branch
          %142 = sbr.rel (%p140) target = $region16
        $region15: #{tpu_custom_call.1} parent=11 // pred_region
          _
        $region16: #{tpu_custom_call.1} parent=11 // pred_fallthru
          _
        // Predicated region
        $region17: #{tpu_custom_call.1} parent=11 // pred_check
          %p143 = pneg %p83
        $region18: #{tpu_custom_call.1} parent=11 // pred_check_branch
          %145 = sbr.rel (%p143) target = $region20
        $region19: #{tpu_custom_call.1} parent=11 // pred_region
          _
        $region20: #{tpu_custom_call.1} parent=11 // pred_fallthru
          _
        // Predicated region
        $region21: #{tpu_custom_call.1} parent=11 // pred_check
          %p146 = pneg %p104
        $region22: #{tpu_custom_call.1} parent=11 // pred_check_branch
          %148 = sbr.rel (%p146) target = $region24
        $region23: #{tpu_custom_call.1} parent=11 // pred_region
          %150 = vsyncadd [#allocation6], 0
          %s152 = sshll.u32 %s3, 4
          %s153 = int_to_ptr.hbm [resolvable:$true] %s152
          %s154 = sshll.u32 [#allocation5], 4
          %s155 = int_to_ptr.vmem [resolvable:$true] %s154
          %157 = dma.hbm_to_vmem [thread:$0]  %s153, 64, %s155, [#allocation6]
        $region24: #{tpu_custom_call.1} parent=11 // pred_fallthru
          _
      $region12: #{tpu_custom_call.1} parent=5 // pred_fallthru
        _
      %p158 = scmp.lt.s32.totalorder %s15, 2
      // Predicated region
      $region25: #{tpu_custom_call.1} parent=5 // pred_check
        %p159 = pneg %p158
      $region26: #{tpu_custom_call.1} parent=5 // pred_check_branch
        %161 = sbr.rel (%p159) target = $region28
      $region27: #{tpu_custom_call.1} parent=5 // pred_region
        // Predicated region
        $region29: #{tpu_custom_call.1} parent=27 // pred_check
          %p162 = pneg %p35
        $region30: #{tpu_custom_call.1} parent=27 // pred_check_branch
          %164 = sbr.rel (%p162) target = $region32
        $region31: #{tpu_custom_call.1} parent=27 // pred_region
          %s165 = sand.u32 %s25, 1
          %s166 = scalar_lea.sflag [#allocation3], %s165
          %s167 = sand.u32 %s25, 1
          %s168 = smul.addr %s167, 128
          %s169 = scalar_lea.vmem [#allocation2], %s168
          %s170 = smul.u32 4, %s15
          %s171 = ssub.s32 6, %s170
          %p172 = scmp.lt.s32.totalorder %s171, 4
          %s173 = scalar_select %p172, %s171, 4
          %s174 = smul.u32 8, %s173
          %s175 = smul.u32 %s174, 4
          %s176 = ssub.s32 128, %s175
          %s177 = sshll.u32 %s176, 4
          %178 = vsyncadd %s166, %s177
          %p179 = scmp.ne.s32.totalorder 0, %s175
          %s180 = smul.addr %s170, 4
          %s181 = smul.addr %s180, 8
          %s182 = scalar_lea.hbm %s0, %s181
          %s183 = smul.u32 %s173, 4
          %s184 = smul.u32 8, %s183
          %s185 = sshll.u32 %s182, 4
          %s186 = int_to_ptr.hbm [resolvable:$true] %s185
          %s187 = sshll.u32 %s169, 4
          %s188 = int_to_ptr.vmem [resolvable:$true] %s187
          %s189 = sshll.u32 %s184, 4
          %193 = dma.hbm_to_vmem [thread:$0]  (%p179), %s186, %s189, %s188, %s166, 128, 128, 8
        $region32: #{tpu_custom_call.1} parent=27 // pred_fallthru
          _
      $region28: #{tpu_custom_call.1} parent=5 // pred_fallthru
        _
      %p194 = scmp.le.s32.totalorder 1, %s15
      %p195 = scmp.lt.s32.totalorder %s15, 3
      %p196 = pnand %p194, %p195
      %p197 = pneg %p196
      // Predicated region
      $region33: #{tpu_custom_call.1} parent=5 // pred_check
        _
      $region34: #{tpu_custom_call.1} parent=5 // pred_check_branch
        %199 = sbr.rel (%p196) target = $region36
      $region35: #{tpu_custom_call.1} parent=5 // pred_region
        %s200 = ssub.s32 %s15, 1
        %s201 = sand.u32 %s28, 1
        %s202 = scalar_lea.sflag [#allocation3], %s201
        %s203 = sand.u32 %s28, 1
        %s204 = smul.addr %s203, 128
        %s205 = scalar_lea.vmem [#allocation2], %s204
        // Predicated region
        $region37: #{tpu_custom_call.1} parent=35 // pred_check
          %p206 = pneg %p41
        $region38: #{tpu_custom_call.1} parent=35 // pred_check_branch
          %208 = sbr.rel (%p206) target = $region40
        $region39: #{tpu_custom_call.1} parent=35 // pred_region
          %210 = dma.done %s202, 2048
        $region40: #{tpu_custom_call.1} parent=35 // pred_fallthru
          _
        // Predicated region
        $region41: #{tpu_custom_call.1} parent=35 // pred_check
          %p211 = pneg %p104
        $region42: #{tpu_custom_call.1} parent=35 // pred_check_branch
          %213 = sbr.rel (%p211) target = $region44
        $region43: #{tpu_custom_call.1} parent=35 // pred_region
          %215 = dma.done [#allocation6], 64
        $region44: #{tpu_custom_call.1} parent=35 // pred_fallthru
          _
        %s216 = sand.u32 %s28, 1
        %s217 = scalar_lea.sflag [#allocation3], %s216
        %s218 = sand.u32 %s28, 1
        %s219 = smul.addr %s218, 128
        %s220 = scalar_lea.vmem [#allocation2], %s219
        %p221 = pneg %p41
        %p222 = pneg %p38
        %p223 = pneg %p62
        %p224 = pneg %p59
        %p225 = pneg %p83
        %p226 = pneg %p80
        %p227 = pneg %p104
        %p228 = pneg %p101
        %p229 = pneg %p125
        %p230 = pneg %p122
        %s231 = smul.u32 4, %s20
        %s232 = ssub.s32 6, %s231
        %p233 = scmp.lt.s32.totalorder %s232, 4
        %s234 = scalar_select %p233, %s232, 4
        %s235 = smul.u32 8, %s234
        %s236 = smul.u32 %s235, 4
        %p237 = scmp.eq.s32.totalorder %s20, 0
        // Predicated region
        $region45: #{tpu_custom_call.1} parent=35 // pred_check
          %p238 = pneg %p237
        $region46: #{tpu_custom_call.1} parent=35 // pred_check_branch
          %240 = sbr.rel (%p238) target = $region48
        $region47: #{tpu_custom_call.1} parent=35 // pred_region
          %241 = vst [vmem:[#allocation7] sm:$0xff] 0.0
        $region48: #{tpu_custom_call.1} parent=35 // pred_fallthru
          _
        %v242 = vld [vmem:[%s205] sm:$0xff]
        %v243 = vld [vmem:[%s205 + $0x8] sm:$0xff]
        %v244 = vld [vmem:[%s205 + $0x10] sm:$0xff]
        %v245 = vld [vmem:[%s205 + $0x18] sm:$0xff]
        %v246 = vld [vmem:[%s205 + $0x20] sm:$0xff]
        %v247 = vld [vmem:[%s205 + $0x28] sm:$0xff]
        %v248 = vld [vmem:[%s205 + $0x30] sm:$0xff]
        %v249 = vld [vmem:[%s205 + $0x38] sm:$0xff]
        %v250 = vld [vmem:[%s205 + $0x40] sm:$0xff]
        %v251 = vld [vmem:[%s205 + $0x48] sm:$0xff]
        %v252 = vld [vmem:[%s205 + $0x50] sm:$0xff]
        %v253 = vld [vmem:[%s205 + $0x58] sm:$0xff]
        %v254 = vld [vmem:[%s205 + $0x60] sm:$0xff]
        %v255 = vld [vmem:[%s205 + $0x68] sm:$0xff]
        %v256 = vld [vmem:[%s205 + $0x70] sm:$0xff]
        %v257 = vld [vmem:[%s205 + $0x78] sm:$0xff]
        %v258 = vld [vmem:[%s1] sm:$0xf]
        %v259 = vand.u32 %v257, 4294901760
        %260 = vmatpush.xpose.msra.mxu0 %v259
        %v261 = vand.u32 %v256, 4294901760
        %262 = vmatpush.xpose.msra.mxu0 %v261
        %v263 = vand.u32 %v255, 4294901760
        %264 = vmatpush.xpose.msra.mxu0 %v263
        %v265 = vand.u32 %v254, 4294901760
        %266 = vmatpush.xpose.msra.mxu0 %v265
        %v267 = vand.u32 %v253, 4294901760
        %268 = vmatpush.xpose.msra.mxu0 %v267
        %v269 = vand.u32 %v252, 4294901760
        %270 = vmatpush.xpose.msra.mxu0 %v269
        %v271 = vand.u32 %v251, 4294901760
        %272 = vmatpush.xpose.msra.mxu0 %v271
        %v273 = vand.u32 %v250, 4294901760
        %274 = vmatpush.xpose.msra.mxu0 %v273
        %v275 = vand.u32 %v249, 4294901760
        %276 = vmatpush.xpose.msra.mxu0 %v275
        %v277 = vand.u32 %v248, 4294901760
        %278 = vmatpush.xpose.msra.mxu0 %v277
        %v279 = vand.u32 %v247, 4294901760
        %280 = vmatpush.xpose.msra.mxu0 %v279
        %v281 = vand.u32 %v246, 4294901760
        %282 = vmatpush.xpose.msra.mxu0 %v281
        %v283 = vand.u32 %v245, 4294901760
        %284 = vmatpush.xpose.msra.mxu0 %v283
        %v285 = vand.u32 %v244, 4294901760
        %286 = vmatpush.xpose.msra.mxu0 %v285
        %v287 = vand.u32 %v243, 4294901760
        %288 = vmatpush.xpose.msra.mxu0 %v287
        %v289 = vand.u32 %v242, 4294901760
        %290 = vmatpush.xpose.msra.mxu0 %v289
        %v291 = vand.u32 %v258, 4294901760
        %v292 = vsub.f32 %v258, %v291
        %v293 = vand.u32 %v292, 4294901760
        %v294 = vsub.f32 %v292, %v293
        %v295 = vand.u32 %v294, 4294901760
        %296 = vmatmul.f32.gmra.mxu0 %v295
        %v297 = vpop.f32.mrf.mxu0
        %v298 = vadd.f32 0.0, %v297
        %299 = vdwg.mxu0
        %v300 = vand.u32 %v257, 4294901760
        %v301 = vsub.f32 %v257, %v300
        %v302 = vand.u32 %v301, 4294901760
        %v303 = vsub.f32 %v301, %v302
        %v304 = vand.u32 %v303, 4294901760
        %305 = vmatpush.xpose.msra.mxu0 %v304
        %v306 = vand.u32 %v256, 4294901760
        %v307 = vsub.f32 %v256, %v306
        %v308 = vand.u32 %v307, 4294901760
        %v309 = vsub.f32 %v307, %v308
        %v310 = vand.u32 %v309, 4294901760
        %311 = vmatpush.xpose.msra.mxu0 %v310
        %v312 = vand.u32 %v255, 4294901760
        %v313 = vsub.f32 %v255, %v312
        %v314 = vand.u32 %v313, 4294901760
        %v315 = vsub.f32 %v313, %v314
        %v316 = vand.u32 %v315, 4294901760
        %317 = vmatpush.xpose.msra.mxu0 %v316
        %v318 = vand.u32 %v254, 4294901760
        %v319 = vsub.f32 %v254, %v318
        %v320 = vand.u32 %v319, 4294901760
        %v321 = vsub.f32 %v319, %v320
        %v322 = vand.u32 %v321, 4294901760
        %323 = vmatpush.xpose.msra.mxu0 %v322
        %v324 = vand.u32 %v253, 4294901760
        %v325 = vsub.f32 %v253, %v324
        %v326 = vand.u32 %v325, 4294901760
        %v327 = vsub.f32 %v325, %v326
        %v328 = vand.u32 %v327, 4294901760
        %329 = vmatpush.xpose.msra.mxu0 %v328
        %v330 = vand.u32 %v252, 4294901760
        %v331 = vsub.f32 %v252, %v330
        %v332 = vand.u32 %v331, 4294901760
        %v333 = vsub.f32 %v331, %v332
        %v334 = vand.u32 %v333, 4294901760
        %335 = vmatpush.xpose.msra.mxu0 %v334
        %v336 = vand.u32 %v251, 4294901760
        %v337 = vsub.f32 %v251, %v336
        %v338 = vand.u32 %v337, 4294901760
        %v339 = vsub.f32 %v337, %v338
        %v340 = vand.u32 %v339, 4294901760
        %341 = vmatpush.xpose.msra.mxu0 %v340
        %v342 = vand.u32 %v250, 4294901760
        %v343 = vsub.f32 %v250, %v342
        %v344 = vand.u32 %v343, 4294901760
        %v345 = vsub.f32 %v343, %v344
        %v346 = vand.u32 %v345, 4294901760
        %347 = vmatpush.xpose.msra.mxu0 %v346
        %v348 = vand.u32 %v249, 4294901760
        %v349 = vsub.f32 %v249, %v348
        %v350 = vand.u32 %v349, 4294901760
        %v351 = vsub.f32 %v349, %v350
        %v352 = vand.u32 %v351, 4294901760
        %353 = vmatpush.xpose.msra.mxu0 %v352
        %v354 = vand.u32 %v248, 4294901760
        %v355 = vsub.f32 %v248, %v354
        %v356 = vand.u32 %v355, 4294901760
        %v357 = vsub.f32 %v355, %v356
        %v358 = vand.u32 %v357, 4294901760
        %359 = vmatpush.xpose.msra.mxu0 %v358
        %v360 = vand.u32 %v247, 4294901760
        %v361 = vsub.f32 %v247, %v360
        %v362 = vand.u32 %v361, 4294901760
        %v363 = vsub.f32 %v361, %v362
        %v364 = vand.u32 %v363, 4294901760
        %365 = vmatpush.xpose.msra.mxu0 %v364
        %v366 = vand.u32 %v246, 4294901760
        %v367 = vsub.f32 %v246, %v366
        %v368 = vand.u32 %v367, 4294901760
        %v369 = vsub.f32 %v367, %v368
        %v370 = vand.u32 %v369, 4294901760
        %371 = vmatpush.xpose.msra.mxu0 %v370
        %v372 = vand.u32 %v245, 4294901760
        %v373 = vsub.f32 %v245, %v372
        %v374 = vand.u32 %v373, 4294901760
        %v375 = vsub.f32 %v373, %v374
        %v376 = vand.u32 %v375, 4294901760
        %377 = vmatpush.xpose.msra.mxu0 %v376
        %v378 = vand.u32 %v244, 4294901760
        %v379 = vsub.f32 %v244, %v378
        %v380 = vand.u32 %v379, 4294901760
        %v381 = vsub.f32 %v379, %v380
        %v382 = vand.u32 %v381, 4294901760
        %383 = vmatpush.xpose.msra.mxu0 %v382
        %v384 = vand.u32 %v243, 4294901760
        %v385 = vsub.f32 %v243, %v384
        %v386 = vand.u32 %v385, 4294901760
        %v387 = vsub.f32 %v385, %v386
        %v388 = vand.u32 %v387, 4294901760
        %389 = vmatpush.xpose.msra.mxu0 %v388
        %v390 = vand.u32 %v242, 4294901760
        %v391 = vsub.f32 %v242, %v390
        %v392 = vand.u32 %v391, 4294901760
        %v393 = vsub.f32 %v391, %v392
        %v394 = vand.u32 %v393, 4294901760
        %395 = vmatpush.xpose.msra.mxu0 %v394
        %v396 = vand.u32 %v258, 4294901760
        %397 = vmatmul.f32.gmra.mxu0 %v396
        %v398 = vpop.f32.mrf.mxu0
        %v399 = vadd.f32 %v298, %v398
        %400 = vdwg.mxu0
        %v401 = vand.u32 %v257, 4294901760
        %v402 = vsub.f32 %v257, %v401
        %403 = vmatpush.xpose.msra.mxu0 %v402
        %v404 = vand.u32 %v256, 4294901760
        %v405 = vsub.f32 %v256, %v404
        %406 = vmatpush.xpose.msra.mxu0 %v405
        %v407 = vand.u32 %v255, 4294901760
        %v408 = vsub.f32 %v255, %v407
        %409 = vmatpush.xpose.msra.mxu0 %v408
        %v410 = vand.u32 %v254, 4294901760
        %v411 = vsub.f32 %v254, %v410
        %412 = vmatpush.xpose.msra.mxu0 %v411
        %v413 = vand.u32 %v253, 4294901760
        %v414 = vsub.f32 %v253, %v413
        %415 = vmatpush.xpose.msra.mxu0 %v414
        %v416 = vand.u32 %v252, 4294901760
        %v417 = vsub.f32 %v252, %v416
        %418 = vmatpush.xpose.msra.mxu0 %v417
        %v419 = vand.u32 %v251, 4294901760
        %v420 = vsub.f32 %v251, %v419
        %421 = vmatpush.xpose.msra.mxu0 %v420
        %v422 = vand.u32 %v250, 4294901760
        %v423 = vsub.f32 %v250, %v422
        %424 = vmatpush.xpose.msra.mxu0 %v423
        %v425 = vand.u32 %v249, 4294901760
        %v426 = vsub.f32 %v249, %v425
        %427 = vmatpush.xpose.msra.mxu0 %v426
        %v428 = vand.u32 %v248, 4294901760
        %v429 = vsub.f32 %v248, %v428
        %430 = vmatpush.xpose.msra.mxu0 %v429
        %v431 = vand.u32 %v247, 4294901760
        %v432 = vsub.f32 %v247, %v431
        %433 = vmatpush.xpose.msra.mxu0 %v432
        %v434 = vand.u32 %v246, 4294901760
        %v435 = vsub.f32 %v246, %v434
        %436 = vmatpush.xpose.msra.mxu0 %v435
        %v437 = vand.u32 %v245, 4294901760
        %v438 = vsub.f32 %v245, %v437
        %439 = vmatpush.xpose.msra.mxu0 %v438
        %v440 = vand.u32 %v244, 4294901760
        %v441 = vsub.f32 %v244, %v440
        %442 = vmatpush.xpose.msra.mxu0 %v441
        %v443 = vand.u32 %v243, 4294901760
        %v444 = vsub.f32 %v243, %v443
        %445 = vmatpush.xpose.msra.mxu0 %v444
        %v446 = vand.u32 %v242, 4294901760
        %v447 = vsub.f32 %v242, %v446
        %448 = vmatpush.xpose.msra.mxu0 %v447
        %v449 = vand.u32 %v258, 4294901760
        %v450 = vsub.f32 %v258, %v449
        %451 = vmatmul.f32.gmra.mxu0 %v450
        %v452 = vpop.f32.mrf.mxu0
        %v453 = vadd.f32 %v399, %v452
        %454 = vdwg.mxu0
        %v455 = vand.u32 %v257, 4294901760
        %456 = vmatpush.xpose.msra.mxu0 %v455
        %v457 = vand.u32 %v256, 4294901760
        %458 = vmatpush.xpose.msra.mxu0 %v457
        %v459 = vand.u32 %v255, 4294901760
        %460 = vmatpush.xpose.msra.mxu0 %v459
        %v461 = vand.u32 %v254, 4294901760
        %462 = vmatpush.xpose.msra.mxu0 %v461
        %v463 = vand.u32 %v253, 4294901760
        %464 = vmatpush.xpose.msra.mxu0 %v463
        %v465 = vand.u32 %v252, 4294901760
        %466 = vmatpush.xpose.msra.mxu0 %v465
        %v467 = vand.u32 %v251, 4294901760
        %468 = vmatpush.xpose.msra.mxu0 %v467
        %v469 = vand.u32 %v250, 4294901760
        %470 = vmatpush.xpose.msra.mxu0 %v469
        %v471 = vand.u32 %v249, 4294901760
        %472 = vmatpush.xpose.msra.mxu0 %v471
        %v473 = vand.u32 %v248, 4294901760
        %474 = vmatpush.xpose.msra.mxu0 %v473
        %v475 = vand.u32 %v247, 4294901760
        %476 = vmatpush.xpose.msra.mxu0 %v475
        %v477 = vand.u32 %v246, 4294901760
        %478 = vmatpush.xpose.msra.mxu0 %v477
        %v479 = vand.u32 %v245, 4294901760
        %480 = vmatpush.xpose.msra.mxu0 %v479
        %v481 = vand.u32 %v244, 4294901760
        %482 = vmatpush.xpose.msra.mxu0 %v481
        %v483 = vand.u32 %v243, 4294901760
        %484 = vmatpush.xpose.msra.mxu0 %v483
        %v485 = vand.u32 %v242, 4294901760
        %486 = vmatpush.xpose.msra.mxu0 %v485
        %v487 = vand.u32 %v258, 4294901760
        %v488 = vsub.f32 %v258, %v487
        %v489 = vand.u32 %v488, 4294901760
        %490 = vmatmul.f32.gmra.mxu0 %v489
        %v491 = vpop.f32.mrf.mxu0
        %v492 = vadd.f32 %v453, %v491
        %493 = vdwg.mxu0
        %v494 = vand.u32 %v257, 4294901760
        %v495 = vsub.f32 %v257, %v494
        %v496 = vand.u32 %v495, 4294901760
        %497 = vmatpush.xpose.msra.mxu0 %v496
        %v498 = vand.u32 %v256, 4294901760
        %v499 = vsub.f32 %v256, %v498
        %v500 = vand.u32 %v499, 4294901760
        %501 = vmatpush.xpose.msra.mxu0 %v500
        %v502 = vand.u32 %v255, 4294901760
        %v503 = vsub.f32 %v255, %v502
        %v504 = vand.u32 %v503, 4294901760
        %505 = vmatpush.xpose.msra.mxu0 %v504
        %v506 = vand.u32 %v254, 4294901760
        %v507 = vsub.f32 %v254, %v506
        %v508 = vand.u32 %v507, 4294901760
        %509 = vmatpush.xpose.msra.mxu0 %v508
        %v510 = vand.u32 %v253, 4294901760
        %v511 = vsub.f32 %v253, %v510
        %v512 = vand.u32 %v511, 4294901760
        %513 = vmatpush.xpose.msra.mxu0 %v512
        %v514 = vand.u32 %v252, 4294901760
        %v515 = vsub.f32 %v252, %v514
        %v516 = vand.u32 %v515, 4294901760
        %517 = vmatpush.xpose.msra.mxu0 %v516
        %v518 = vand.u32 %v251, 4294901760
        %v519 = vsub.f32 %v251, %v518
        %v520 = vand.u32 %v519, 4294901760
        %521 = vmatpush.xpose.msra.mxu0 %v520
        %v522 = vand.u32 %v250, 4294901760
        %v523 = vsub.f32 %v250, %v522
        %v524 = vand.u32 %v523, 4294901760
        %525 = vmatpush.xpose.msra.mxu0 %v524
        %v526 = vand.u32 %v249, 4294901760
        %v527 = vsub.f32 %v249, %v526
        %v528 = vand.u32 %v527, 4294901760
        %529 = vmatpush.xpose.msra.mxu0 %v528
        %v530 = vand.u32 %v248, 4294901760
        %v531 = vsub.f32 %v248, %v530
        %v532 = vand.u32 %v531, 4294901760
        %533 = vmatpush.xpose.msra.mxu0 %v532
        %v534 = vand.u32 %v247, 4294901760
        %v535 = vsub.f32 %v247, %v534
        %v536 = vand.u32 %v535, 4294901760
        %537 = vmatpush.xpose.msra.mxu0 %v536
        %v538 = vand.u32 %v246, 4294901760
        %v539 = vsub.f32 %v246, %v538
        %v540 = vand.u32 %v539, 4294901760
        %541 = vmatpush.xpose.msra.mxu0 %v540
        %v542 = vand.u32 %v245, 4294901760
        %v543 = vsub.f32 %v245, %v542
        %v544 = vand.u32 %v543, 4294901760
        %545 = vmatpush.xpose.msra.mxu0 %v544
        %v546 = vand.u32 %v244, 4294901760
        %v547 = vsub.f32 %v244, %v546
        %v548 = vand.u32 %v547, 4294901760
        %549 = vmatpush.xpose.msra.mxu0 %v548
        %v550 = vand.u32 %v243, 4294901760
        %v551 = vsub.f32 %v243, %v550
        %v552 = vand.u32 %v551, 4294901760
        %553 = vmatpush.xpose.msra.mxu0 %v552
        %v554 = vand.u32 %v242, 4294901760
        %v555 = vsub.f32 %v242, %v554
        %v556 = vand.u32 %v555, 4294901760
        %557 = vmatpush.xpose.msra.mxu0 %v556
        %v558 = vand.u32 %v258, 4294901760
        %559 = vmatmul.f32.gmra.mxu0 %v558
        %v560 = vpop.f32.mrf.mxu0
        %v561 = vadd.f32 %v492, %v560
        %562 = vdwg.mxu0
        %v563 = vand.u32 %v257, 4294901760
        %564 = vmatpush.xpose.msra.mxu0 %v563
        %v565 = vand.u32 %v256, 4294901760
        %566 = vmatpush.xpose.msra.mxu0 %v565
        %v567 = vand.u32 %v255, 4294901760
        %568 = vmatpush.xpose.msra.mxu0 %v567
        %v569 = vand.u32 %v254, 4294901760
        %570 = vmatpush.xpose.msra.mxu0 %v569
        %v571 = vand.u32 %v253, 4294901760
        %572 = vmatpush.xpose.msra.mxu0 %v571
        %v573 = vand.u32 %v252, 4294901760
        %574 = vmatpush.xpose.msra.mxu0 %v573
        %v575 = vand.u32 %v251, 4294901760
        %576 = vmatpush.xpose.msra.mxu0 %v575
        %v577 = vand.u32 %v250, 4294901760
        %578 = vmatpush.xpose.msra.mxu0 %v577
        %v579 = vand.u32 %v249, 4294901760
        %580 = vmatpush.xpose.msra.mxu0 %v579
        %v581 = vand.u32 %v248, 4294901760
        %582 = vmatpush.xpose.msra.mxu0 %v581
        %v583 = vand.u32 %v247, 4294901760
        %584 = vmatpush.xpose.msra.mxu0 %v583
        %v585 = vand.u32 %v246, 4294901760
        %586 = vmatpush.xpose.msra.mxu0 %v585
        %v587 = vand.u32 %v245, 4294901760
        %588 = vmatpush.xpose.msra.mxu0 %v587
        %v589 = vand.u32 %v244, 4294901760
        %590 = vmatpush.xpose.msra.mxu0 %v589
        %v591 = vand.u32 %v243, 4294901760
        %592 = vmatpush.xpose.msra.mxu0 %v591
        %v593 = vand.u32 %v242, 4294901760
        %594 = vmatpush.xpose.msra.mxu0 %v593
        %v595 = vand.u32 %v258, 4294901760
        %596 = vmatmul.f32.gmra.mxu0 %v595
        %v597 = vpop.f32.mrf.mxu0
        %v598 = vadd.f32 %v561, %v597
        %599 = vdwg.mxu0
        %v600 = vmul.f32 %v598, 2.0
        %v601 = vld [vmem:[%s2] sm:$0xf]
        %603 = vset.pattern.permute.xlu0 0
        %604 = vperm.xlu0 %603, %v601
        %v605 = vpop.permute.xlu0 %604
        %v607 = vsub.f32 %v600, %v605
        %vm608 = vcmask 1043456
        %v609 = vsel %vm608, %v607, -inf
        %v610 = vrot.slane %v609, 4
        %v611 = vmax.f32 %v609, %v610
        %v612 = vrot.slane %v611, 2
        %v613 = vmax.f32 %v611, %v612
        %v614 = vrot.slane %v613, 1
        %v615 = vmax.f32 %v613, %v614
        %v616 = vsub.f32 %v607, %v615
        %v617 = vmul.f32 %v616, 1.442695
        %v618 = vpow.pop %v617
        %v619 = vsel %vm608, %v618, 0.0
        %v620 = vrot.slane %v619, 4
        %v621 = vadd.f32 %v619, %v620
        %v622 = vrot.slane %v621, 2
        %v623 = vadd.f32 %v621, %v622
        %v624 = vrot.slane %v623, 1
        %v625 = vadd.f32 %v623, %v624
        %v626 = vlog2.pop %v625
        %v627 = vmul.f32 %v626, 0.6931472
        %v628 = vadd.f32 %v615, %v627
        %v629 = vld [vmem:[#allocation5] sm:$0xf]
        %v630 = vmul.f32 %v607, %v629
        %v631 = vsel %vm608, %v630, 0.0
        %v632 = vrot.slane %v631, 4
        %v633 = vadd.f32 %v631, %v632
        %v634 = vrot.slane %v633, 2
        %v635 = vadd.f32 %v633, %v634
        %v636 = vrot.slane %v635, 1
        %v637 = vadd.f32 %v635, %v636
        %v638 = vsub.f32 %v628, %v637
        %s639 = smul.u32 %s20, 4
        %s640 = ssub.s32 6, %s639
        %p641 = scmp.lt.s32.totalorder %s640, 4
        %s642 = scalar_select %p641, %s640, 4
        %s643 = smul.u32 %s642, 32
        %v644 = vlaneseq
        %v645 = vand.u32 %v644, 127
        %v646 = vld [vmem:[#allocation7] sm:$0xff]
        %v647 = vstv %s643
        %vm648 = vcmp.lt.s32.totalorder %v645, %v647
        %v649 = vsel %vm648, %v638, 0.0
        %vm650 = vcmask 1040384
        %v651 = vsel %vm650, %v649, 0.0
        %652 = vadd.xlane.f32.xlu0 %v651
        %v653 = vpop.xlane.xlu0 %652
        %v654 = vrot.slane %v653, 4
        %v655 = vadd.f32 %v653, %v654
        %v656 = vrot.slane %v655, 2
        %v657 = vadd.f32 %v655, %v656
        %v658 = vrot.slane %v657, 1
        %v659 = vadd.f32 %v657, %v658
        %s660 = vtos %v659
        %v661 = vstv %s660
        %v662 = vadd.f32 %v646, %v661
        %663 = vst [vmem:[#allocation7] sm:$0xff] %v662
        // Predicated region
        $region49: #{tpu_custom_call.1} parent=35 // pred_check
          %p664 = pneg %p122
        $region50: #{tpu_custom_call.1} parent=35 // pred_check_branch
          %666 = sbr.rel (%p664) target = $region52
        $region51: #{tpu_custom_call.1} parent=35 // pred_region
          %668 = vsyncadd [#allocation4], 0
          %s670 = sshll.u32 [#allocation7], 4
          %s671 = int_to_ptr.vmem [resolvable:$true] %s670
          %s672 = sshll.u32 %s4, 4
          %s673 = int_to_ptr.hbm [resolvable:$true] %s672
          %675 = dma.vmem_to_hbm [thread:$0]  %s671, 128, %s673, [#allocation4]
        $region52: #{tpu_custom_call.1} parent=35 // pred_fallthru
          _
        // Predicated region
        $region53: #{tpu_custom_call.1} parent=35 // pred_check
          %p676 = pneg %p122
        $region54: #{tpu_custom_call.1} parent=35 // pred_check_branch
          %678 = sbr.rel (%p676) target = $region56
        $region55: #{tpu_custom_call.1} parent=35 // pred_region
          %680 = dma.done [#allocation4], 128
        $region56: #{tpu_custom_call.1} parent=35 // pred_fallthru
          _
      $region36: #{tpu_custom_call.1} parent=5 // pred_fallthru
        _
      %p681 = scmp.le.s32.totalorder 2, %s15
      // Predicated region
      $region57: #{tpu_custom_call.1} parent=5 // pred_check
        %p682 = pneg %p681
      $region58: #{tpu_custom_call.1} parent=5 // pred_check_branch
        %684 = sbr.rel (%p682) target = $region60
      $region59: #{tpu_custom_call.1} parent=5 // pred_region
        %s685 = ssub.s32 %s15, 2
      $region60: #{tpu_custom_call.1} parent=5 // pred_fallthru
        _
    $region6: #{tpu_custom_call.1} parent=1 // loop_footer
      %s19 = sadd.s32 1, %s15
    $region7: #{tpu_custom_call.1} parent=1 // loop_footer_branch
      %14 = sbr.rel target = $region3
    $region8: #{tpu_custom_call.1} parent=1 // loop_exit
      _
    %686 = vsyncpa [#allocation3], 1
    %s687 = scalar_lea.sflag [#allocation3], 1
    %688 = vsyncpa %s687, 1
    %689 = vsyncpa [#allocation6], 1
    %690 = vsyncpa [#allocation4], 1
    %s691 = scalar_lea.sflag [#allocation4], 1
    %692 = vsyncpa %s691, 1

</llo_original>
